<compile_context>
chip_gen: v5e
topology: v5e:2x2
jax: 0.10.0
libtpu: 0.0.40
codegen_flags: <defaults>
</compile_context>

<pallas_src>
import functools

import jax
import jax.numpy as jnp
import numpy as np
from jax import lax
from jax.experimental import pallas as pl
from jax.experimental.pallas import tpu as pltpu


def seq2vec_kernel(x_ref, w_ih_ref, w_hh_ref, b_ref,
                   fc1_w_ref, fc1_b_ref, fc2_w_ref, fc2_b_ref,
                   fc3_w_ref, fc3_b_ref, fc4_w_ref, fc4_b_ref,
                   eps_ref,
                   z_ref, dec_ref, kl_ref,
                   *, seq_len, latent):
    SB, _ = x_ref.shape
    B = SB // seq_len
    H = w_hh_ref.shape[0]

    # --- hoisted input projection: one MXU call for the whole sequence,
    #     LSTM bias folded in.  xg rows are time-major: step t -> rows
    #     [t*B, (t+1)*B).
    xg = (jnp.dot(x_ref[...], w_ih_ref[...],
                  preferred_element_type=jnp.float32)
          + b_ref[...])                                        # (S*B, 4H)

    w_hh = w_hh_ref[...]                                       # (H, 4H)

    # --- recurrence: h/c carried in vregs, single matmul per step.
    h = jnp.zeros((B, H), jnp.float32)
    c = jnp.zeros((B, H), jnp.float32)
    for t in range(seq_len):                                   # static unroll
        gates = xg[t * B:(t + 1) * B, :] + jnp.dot(
            h, w_hh, preferred_element_type=jnp.float32)       # (B, 4H) i,f,g,o
        i = jax.nn.sigmoid(gates[:, 0 * H:1 * H])
        f = jax.nn.sigmoid(gates[:, 1 * H:2 * H])
        g = jnp.tanh(gates[:, 2 * H:3 * H])
        o = jax.nn.sigmoid(gates[:, 3 * H:4 * H])
        c = f * c + i * g
        h = o * jnp.tanh(c)

    # --- encoder head: fc1 -> fused fc21/fc22
    h1 = jnp.maximum(
        jnp.dot(h, fc1_w_ref[...], preferred_element_type=jnp.float32)
        + fc1_b_ref[...], 0.0)
    mu_logvar = (jnp.dot(h1, fc2_w_ref[...],
                         preferred_element_type=jnp.float32)
                 + fc2_b_ref[...])                             # (B, 2*latent)
    mu = mu_logvar[:, :latent]
    logvar = mu_logvar[:, latent:]

    # --- reparameterize (eps supplied from outside for determinism)
    std = jnp.exp(0.5 * logvar)
    z = mu + eps_ref[...] * std

    # --- KL divergence
    var = jnp.exp(logvar)
    kl = 0.5 * jnp.sum(var + mu * mu - logvar - 1.0, axis=-1, keepdims=True)

    # --- decode
    h3 = jnp.maximum(
        jnp.dot(z, fc3_w_ref[...], preferred_element_type=jnp.float32)
        + fc3_b_ref[...], 0.0)
    dec = jnp.dot(h3, fc4_w_ref[...],
                  preferred_element_type=jnp.float32) + fc4_b_ref[...]

    z_ref[...] = z
    dec_ref[...] = dec
    kl_ref[...] = kl


def seq_to_one_vector(x, params, eps):
    """x: (B, S, D) float32 batch-first (like PyTorch), eps: (B, latent)."""
    B, S, D = x.shape
    latent = params['fc21_w'].shape[1]
    n_out = params['fc4_w'].shape[1]

    # Time-major flattened input so each recurrence step reads a contiguous
    # (B, 4H) row slab of the precomputed gate tensor with a static slice.
    x_tm = jnp.transpose(x, (1, 0, 2)).reshape(S * B, D)

    # Fuse fc21/fc22 into a single (hidden, 2*latent) head.
    fc2_w = jnp.concatenate([params['fc21_w'], params['fc22_w']], axis=1)
    fc2_b = jnp.concatenate([params['fc21_b'], params['fc22_b']], axis=1)

    vmem = pl.BlockSpec(memory_space=pltpu.MemorySpace.VMEM)
    args = (x_tm, params['w_ih'], params['w_hh'], params['b'],
            params['fc1_w'], params['fc1_b'], fc2_w, fc2_b,
            params['fc3_w'], params['fc3_b'],
            params['fc4_w'], params['fc4_b'], eps)

    kernel = functools.partial(seq2vec_kernel, seq_len=S, latent=latent)

    z, dec, kl = pl.pallas_call(
        kernel,
        out_shape=(jax.ShapeDtypeStruct((B, latent), jnp.float32),
                   jax.ShapeDtypeStruct((B, n_out), jnp.float32),
                   jax.ShapeDtypeStruct((B, 1), jnp.float32)),
        in_specs=[vmem] * len(args),
        out_specs=(vmem, vmem, vmem),
        compiler_params=pltpu.CompilerParams(
            vmem_limit_bytes=32 * 1024 * 1024),
    )(*args)
    return z, dec, kl[:, 0]


def reference(x, params, eps):
    """Pure-JAX reference mirroring the PyTorch forward."""
    B, S, D = x.shape
    H = params['w_hh'].shape[0]
    h = jnp.zeros((B, H), jnp.float32)
    c = jnp.zeros((B, H), jnp.float32)
    for t in range(S):
        gates = x[:, t, :] @ params['w_ih'] + h @ params['w_hh'] + params['b']
        i = jax.nn.sigmoid(gates[:, :H])
        f = jax.nn.sigmoid(gates[:, H:2 * H])
        g = jnp.tanh(gates[:, 2 * H:3 * H])
        o = jax.nn.sigmoid(gates[:, 3 * H:])
        c = f * c + i * g
        h = o * jnp.tanh(c)
    h1 = jax.nn.relu(h @ params['fc1_w'] + params['fc1_b'])
    mu = h1 @ params['fc21_w'] + params['fc21_b']
    logvar = h1 @ params['fc22_w'] + params['fc22_b']
    z = mu + eps * jnp.exp(0.5 * logvar)
    kl = 0.5 * jnp.sum(jnp.exp(logvar) + mu ** 2 - logvar - 1.0, axis=-1)
    h3 = jax.nn.relu(z @ params['fc3_w'] + params['fc3_b'])
    dec = h3 @ params['fc4_w'] + params['fc4_b']
    return z, dec, kl


def init_params(key, input_size, rnn_hidden, hidden, latent, n_out):
    ks = jax.random.split(key, 12)
    s = 0.1
    f32 = jnp.float32
    return {
        # LSTM weights stored as (in, 4H); gate order i,f,g,o; combined bias.
        'w_ih': (s * jax.random.normal(ks[0], (input_size, 4 * rnn_hidden))).astype(f32),
        'w_hh': (s * jax.random.normal(ks[1], (rnn_hidden, 4 * rnn_hidden))).astype(f32),
        'b':    (s * jax.random.normal(ks[2], (1, 4 * rnn_hidden))).astype(f32),
        'fc1_w':  (s * jax.random.normal(ks[3], (rnn_hidden, hidden))).astype(f32),
        'fc1_b':  (s * jax.random.normal(ks[4], (1, hidden))).astype(f32),
        'fc21_w': (s * jax.random.normal(ks[5], (hidden, latent))).astype(f32),
        'fc21_b': (s * jax.random.normal(ks[6], (1, latent))).astype(f32),
        'fc22_w': (s * jax.random.normal(ks[7], (hidden, latent))).astype(f32),
        'fc22_b': (s * jax.random.normal(ks[8], (1, latent))).astype(f32),
        'fc3_w':  (s * jax.random.normal(ks[9], (latent, hidden))).astype(f32),
        'fc3_b':  (s * jax.random.normal(ks[10], (1, hidden))).astype(f32),
        'fc4_w':  (s * jax.random.normal(ks[11], (hidden, n_out))).astype(f32),
        'fc4_b':  jnp.zeros((1, n_out), f32),
    }


if __name__ == "__main__":
    # small shapes: B=8, S=8, input_size=16, rnn_hidden=32, hidden=32, latent=16, out=8
    B, S, D = 8, 8, 16
    RNN_H, HID, LAT, NOUT = 32, 32, 16, 8

    key = jax.random.PRNGKey(0)
    k_x, k_eps, k_p = jax.random.split(key, 3)
    x = jax.random.normal(k_x, (B, S, D), dtype=jnp.float32)
    eps = jax.random.normal(k_eps, (B, LAT), dtype=jnp.float32)
    params = init_params(k_p, D, RNN_H, HID, LAT, NOUT)

    z, dec, kl = jax.block_until_ready(seq_to_one_vector(x, params, eps))
    z_r, dec_r, kl_r = reference(x, params, eps)

    np.testing.assert_allclose(np.asarray(z), np.asarray(z_r), rtol=1e-5, atol=1e-5)
    np.testing.assert_allclose(np.asarray(dec), np.asarray(dec_r), rtol=1e-5, atol=1e-5)
    np.testing.assert_allclose(np.asarray(kl), np.asarray(kl_r), rtol=1e-5, atol=1e-5)

    print("KERNEL_OK")
</pallas_src>

<mosaic_0001>
module attributes {stable_mosaic.version = 11 : i64} {
  func.func @seq2vec_kernel(%arg0: memref<64x16xf32, #tpu.memory_space<vmem>>, %arg1: memref<16x128xf32, #tpu.memory_space<vmem>>, %arg2: memref<32x128xf32, #tpu.memory_space<vmem>>, %arg3: memref<1x128xf32, #tpu.memory_space<vmem>>, %arg4: memref<32x32xf32, #tpu.memory_space<vmem>>, %arg5: memref<1x32xf32, #tpu.memory_space<vmem>>, %arg6: memref<32x32xf32, #tpu.memory_space<vmem>>, %arg7: memref<1x32xf32, #tpu.memory_space<vmem>>, %arg8: memref<16x32xf32, #tpu.memory_space<vmem>>, %arg9: memref<1x32xf32, #tpu.memory_space<vmem>>, %arg10: memref<32x8xf32, #tpu.memory_space<vmem>>, %arg11: memref<1x8xf32, #tpu.memory_space<vmem>>, %arg12: memref<8x16xf32, #tpu.memory_space<vmem>>, %arg13: memref<8x16xf32, #tpu.memory_space<vmem>>, %arg14: memref<8x8xf32, #tpu.memory_space<vmem>>, %arg15: memref<8x1xf32, #tpu.memory_space<vmem>>) attributes {dimension_semantics = [], scalar_prefetch = 0 : i64, scratch_operands = 0 : i64, tpu.core_type = #tpu.core_type<tc>} {
    %c0 = arith.constant 0 : index
    %c0_0 = arith.constant 0 : index
    %0 = vector.load %arg0[%c0, %c0_0] : memref<64x16xf32, #tpu.memory_space<vmem>>, vector<64x16xf32>
    %c0_1 = arith.constant 0 : index
    %c0_2 = arith.constant 0 : index
    %1 = vector.load %arg1[%c0_1, %c0_2] : memref<16x128xf32, #tpu.memory_space<vmem>>, vector<16x128xf32>
    %cst = arith.constant dense<0.000000e+00> : vector<64x128xf32>
    %2 = tpu.matmul %0, %1, %cst {dimension_numbers = #tpu.dot_dimension_numbers<[1], [0], [0], [1], [0, 0, 1, 1], [], []>} : vector<64x16xf32>, vector<16x128xf32>, vector<64x128xf32> -> vector<64x128xf32>
    %c0_3 = arith.constant 0 : index
    %c0_4 = arith.constant 0 : index
    %3 = vector.load %arg3[%c0_3, %c0_4] : memref<1x128xf32, #tpu.memory_space<vmem>>, vector<1x128xf32>
    %4 = vector.broadcast %3 : vector<1x128xf32> to vector<64x128xf32>
    %5 = arith.addf %2, %4 : vector<64x128xf32>
    %c0_5 = arith.constant 0 : index
    %c0_6 = arith.constant 0 : index
    %6 = vector.load %arg2[%c0_5, %c0_6] : memref<32x128xf32, #tpu.memory_space<vmem>>, vector<32x128xf32>
    %cst_7 = arith.constant 0.000000e+00 : f32
    %7 = vector.broadcast %cst_7 : f32 to vector<8x32xf32>
    %cst_8 = arith.constant 0.000000e+00 : f32
    %8 = vector.broadcast %cst_8 : f32 to vector<8x32xf32>
    %9 = vector.extract_strided_slice %5 {offsets = [0, 0], sizes = [8, 128], strides = [1, 1]} : vector<64x128xf32> to vector<8x128xf32>
    %cst_9 = arith.constant dense<0.000000e+00> : vector<8x128xf32>
    %10 = tpu.matmul %7, %6, %cst_9 {dimension_numbers = #tpu.dot_dimension_numbers<[1], [0], [0], [1], [0, 0, 1, 1], [], []>} : vector<8x32xf32>, vector<32x128xf32>, vector<8x128xf32> -> vector<8x128xf32>
    %11 = arith.addf %9, %10 : vector<8x128xf32>
    %12 = vector.extract_strided_slice %11 {offsets = [0, 0], sizes = [8, 32], strides = [1, 1]} : vector<8x128xf32> to vector<8x32xf32>
    %13 = arith.negf %12 : vector<8x32xf32>
    %14 = math.exp %13 : vector<8x32xf32>
    %cst_10 = arith.constant 1.000000e+00 : f32
    %15 = vector.broadcast %cst_10 : f32 to vector<8x32xf32>
    %16 = arith.addf %15, %14 : vector<8x32xf32>
    %17 = arith.divf %15, %16 : vector<8x32xf32>
    %18 = vector.extract_strided_slice %11 {offsets = [0, 32], sizes = [8, 32], strides = [1, 1]} : vector<8x128xf32> to vector<8x32xf32>
    %19 = arith.negf %18 : vector<8x32xf32>
    %20 = math.exp %19 : vector<8x32xf32>
    %cst_11 = arith.constant 1.000000e+00 : f32
    %21 = vector.broadcast %cst_11 : f32 to vector<8x32xf32>
    %22 = arith.addf %21, %20 : vector<8x32xf32>
    %23 = arith.divf %21, %22 : vector<8x32xf32>
    %24 = vector.extract_strided_slice %11 {offsets = [0, 64], sizes = [8, 32], strides = [1, 1]} : vector<8x128xf32> to vector<8x32xf32>
    %25 = math.tanh %24 : vector<8x32xf32>
    %26 = vector.extract_strided_slice %11 {offsets = [0, 96], sizes = [8, 32], strides = [1, 1]} : vector<8x128xf32> to vector<8x32xf32>
    %27 = arith.negf %26 : vector<8x32xf32>
    %28 = math.exp %27 : vector<8x32xf32>
    %cst_12 = arith.constant 1.000000e+00 : f32
    %29 = vector.broadcast %cst_12 : f32 to vector<8x32xf32>
    %30 = arith.addf %29, %28 : vector<8x32xf32>
    %31 = arith.divf %29, %30 : vector<8x32xf32>
    %32 = arith.mulf %23, %8 : vector<8x32xf32>
    %33 = arith.mulf %17, %25 : vector<8x32xf32>
    %34 = arith.addf %32, %33 : vector<8x32xf32>
    %35 = math.tanh %34 : vector<8x32xf32>
    %36 = arith.mulf %31, %35 : vector<8x32xf32>
    %37 = vector.extract_strided_slice %5 {offsets = [8, 0], sizes = [8, 128], strides = [1, 1]} : vector<64x128xf32> to vector<8x128xf32>
    %cst_13 = arith.constant dense<0.000000e+00> : vector<8x128xf32>
    %38 = tpu.matmul %36, %6, %cst_13 {dimension_numbers = #tpu.dot_dimension_numbers<[1], [0], [0], [1], [0, 0, 1, 1], [], []>} : vector<8x32xf32>, vector<32x128xf32>, vector<8x128xf32> -> vector<8x128xf32>
    %39 = arith.addf %37, %38 : vector<8x128xf32>
    %40 = vector.extract_strided_slice %39 {offsets = [0, 0], sizes = [8, 32], strides = [1, 1]} : vector<8x128xf32> to vector<8x32xf32>
    %41 = arith.negf %40 : vector<8x32xf32>
    %42 = math.exp %41 : vector<8x32xf32>
    %cst_14 = arith.constant 1.000000e+00 : f32
    %43 = vector.broadcast %cst_14 : f32 to vector<8x32xf32>
    %44 = arith.addf %43, %42 : vector<8x32xf32>
    %45 = arith.divf %43, %44 : vector<8x32xf32>
    %46 = vector.extract_strided_slice %39 {offsets = [0, 32], sizes = [8, 32], strides = [1, 1]} : vector<8x128xf32> to vector<8x32xf32>
    %47 = arith.negf %46 : vector<8x32xf32>
    %48 = math.exp %47 : vector<8x32xf32>
    %cst_15 = arith.constant 1.000000e+00 : f32
    %49 = vector.broadcast %cst_15 : f32 to vector<8x32xf32>
    %50 = arith.addf %49, %48 : vector<8x32xf32>
    %51 = arith.divf %49, %50 : vector<8x32xf32>
    %52 = vector.extract_strided_slice %39 {offsets = [0, 64], sizes = [8, 32], strides = [1, 1]} : vector<8x128xf32> to vector<8x32xf32>
    %53 = math.tanh %52 : vector<8x32xf32>
    %54 = vector.extract_strided_slice %39 {offsets = [0, 96], sizes = [8, 32], strides = [1, 1]} : vector<8x128xf32> to vector<8x32xf32>
    %55 = arith.negf %54 : vector<8x32xf32>
    %56 = math.exp %55 : vector<8x32xf32>
    %cst_16 = arith.constant 1.000000e+00 : f32
    %57 = vector.broadcast %cst_16 : f32 to vector<8x32xf32>
    %58 = arith.addf %57, %56 : vector<8x32xf32>
    %59 = arith.divf %57, %58 : vector<8x32xf32>
    %60 = arith.mulf %51, %34 : vector<8x32xf32>
    %61 = arith.mulf %45, %53 : vector<8x32xf32>
    %62 = arith.addf %60, %61 : vector<8x32xf32>
    %63 = math.tanh %62 : vector<8x32xf32>
    %64 = arith.mulf %59, %63 : vector<8x32xf32>
    %65 = vector.extract_strided_slice %5 {offsets = [16, 0], sizes = [8, 128], strides = [1, 1]} : vector<64x128xf32> to vector<8x128xf32>
    %cst_17 = arith.constant dense<0.000000e+00> : vector<8x128xf32>
    %66 = tpu.matmul %64, %6, %cst_17 {dimension_numbers = #tpu.dot_dimension_numbers<[1], [0], [0], [1], [0, 0, 1, 1], [], []>} : vector<8x32xf32>, vector<32x128xf32>, vector<8x128xf32> -> vector<8x128xf32>
    %67 = arith.addf %65, %66 : vector<8x128xf32>
    %68 = vector.extract_strided_slice %67 {offsets = [0, 0], sizes = [8, 32], strides = [1, 1]} : vector<8x128xf32> to vector<8x32xf32>
    %69 = arith.negf %68 : vector<8x32xf32>
    %70 = math.exp %69 : vector<8x32xf32>
    %cst_18 = arith.constant 1.000000e+00 : f32
    %71 = vector.broadcast %cst_18 : f32 to vector<8x32xf32>
    %72 = arith.addf %71, %70 : vector<8x32xf32>
    %73 = arith.divf %71, %72 : vector<8x32xf32>
    %74 = vector.extract_strided_slice %67 {offsets = [0, 32], sizes = [8, 32], strides = [1, 1]} : vector<8x128xf32> to vector<8x32xf32>
    %75 = arith.negf %74 : vector<8x32xf32>
    %76 = math.exp %75 : vector<8x32xf32>
    %cst_19 = arith.constant 1.000000e+00 : f32
    %77 = vector.broadcast %cst_19 : f32 to vector<8x32xf32>
    %78 = arith.addf %77, %76 : vector<8x32xf32>
    %79 = arith.divf %77, %78 : vector<8x32xf32>
    %80 = vector.extract_strided_slice %67 {offsets = [0, 64], sizes = [8, 32], strides = [1, 1]} : vector<8x128xf32> to vector<8x32xf32>
    %81 = math.tanh %80 : vector<8x32xf32>
    %82 = vector.extract_strided_slice %67 {offsets = [0, 96], sizes = [8, 32], strides = [1, 1]} : vector<8x128xf32> to vector<8x32xf32>
    %83 = arith.negf %82 : vector<8x32xf32>
    %84 = math.exp %83 : vector<8x32xf32>
    %cst_20 = arith.constant 1.000000e+00 : f32
    %85 = vector.broadcast %cst_20 : f32 to vector<8x32xf32>
    %86 = arith.addf %85, %84 : vector<8x32xf32>
    %87 = arith.divf %85, %86 : vector<8x32xf32>
    %88 = arith.mulf %79, %62 : vector<8x32xf32>
    %89 = arith.mulf %73, %81 : vector<8x32xf32>
    %90 = arith.addf %88, %89 : vector<8x32xf32>
    %91 = math.tanh %90 : vector<8x32xf32>
    %92 = arith.mulf %87, %91 : vector<8x32xf32>
    %93 = vector.extract_strided_slice %5 {offsets = [24, 0], sizes = [8, 128], strides = [1, 1]} : vector<64x128xf32> to vector<8x128xf32>
    %cst_21 = arith.constant dense<0.000000e+00> : vector<8x128xf32>
    %94 = tpu.matmul %92, %6, %cst_21 {dimension_numbers = #tpu.dot_dimension_numbers<[1], [0], [0], [1], [0, 0, 1, 1], [], []>} : vector<8x32xf32>, vector<32x128xf32>, vector<8x128xf32> -> vector<8x128xf32>
    %95 = arith.addf %93, %94 : vector<8x128xf32>
    %96 = vector.extract_strided_slice %95 {offsets = [0, 0], sizes = [8, 32], strides = [1, 1]} : vector<8x128xf32> to vector<8x32xf32>
    %97 = arith.negf %96 : vector<8x32xf32>
    %98 = math.exp %97 : vector<8x32xf32>
    %cst_22 = arith.constant 1.000000e+00 : f32
    %99 = vector.broadcast %cst_22 : f32 to vector<8x32xf32>
    %100 = arith.addf %99, %98 : vector<8x32xf32>
    %101 = arith.divf %99, %100 : vector<8x32xf32>
    %102 = vector.extract_strided_slice %95 {offsets = [0, 32], sizes = [8, 32], strides = [1, 1]} : vector<8x128xf32> to vector<8x32xf32>
    %103 = arith.negf %102 : vector<8x32xf32>
    %104 = math.exp %103 : vector<8x32xf32>
    %cst_23 = arith.constant 1.000000e+00 : f32
    %105 = vector.broadcast %cst_23 : f32 to vector<8x32xf32>
    %106 = arith.addf %105, %104 : vector<8x32xf32>
    %107 = arith.divf %105, %106 : vector<8x32xf32>
    %108 = vector.extract_strided_slice %95 {offsets = [0, 64], sizes = [8, 32], strides = [1, 1]} : vector<8x128xf32> to vector<8x32xf32>
    %109 = math.tanh %108 : vector<8x32xf32>
    %110 = vector.extract_strided_slice %95 {offsets = [0, 96], sizes = [8, 32], strides = [1, 1]} : vector<8x128xf32> to vector<8x32xf32>
    %111 = arith.negf %110 : vector<8x32xf32>
    %112 = math.exp %111 : vector<8x32xf32>
    %cst_24 = arith.constant 1.000000e+00 : f32
    %113 = vector.broadcast %cst_24 : f32 to vector<8x32xf32>
    %114 = arith.addf %113, %112 : vector<8x32xf32>
    %115 = arith.divf %113, %114 : vector<8x32xf32>
    %116 = arith.mulf %107, %90 : vector<8x32xf32>
    %117 = arith.mulf %101, %109 : vector<8x32xf32>
    %118 = arith.addf %116, %117 : vector<8x32xf32>
    %119 = math.tanh %118 : vector<8x32xf32>
    %120 = arith.mulf %115, %119 : vector<8x32xf32>
    %121 = vector.extract_strided_slice %5 {offsets = [32, 0], sizes = [8, 128], strides = [1, 1]} : vector<64x128xf32> to vector<8x128xf32>
    %cst_25 = arith.constant dense<0.000000e+00> : vector<8x128xf32>
    %122 = tpu.matmul %120, %6, %cst_25 {dimension_numbers = #tpu.dot_dimension_numbers<[1], [0], [0], [1], [0, 0, 1, 1], [], []>} : vector<8x32xf32>, vector<32x128xf32>, vector<8x128xf32> -> vector<8x128xf32>
    %123 = arith.addf %121, %122 : vector<8x128xf32>
    %124 = vector.extract_strided_slice %123 {offsets = [0, 0], sizes = [8, 32], strides = [1, 1]} : vector<8x128xf32> to vector<8x32xf32>
    %125 = arith.negf %124 : vector<8x32xf32>
    %126 = math.exp %125 : vector<8x32xf32>
    %cst_26 = arith.constant 1.000000e+00 : f32
    %127 = vector.broadcast %cst_26 : f32 to vector<8x32xf32>
    %128 = arith.addf %127, %126 : vector<8x32xf32>
    %129 = arith.divf %127, %128 : vector<8x32xf32>
    %130 = vector.extract_strided_slice %123 {offsets = [0, 32], sizes = [8, 32], strides = [1, 1]} : vector<8x128xf32> to vector<8x32xf32>
    %131 = arith.negf %130 : vector<8x32xf32>
    %132 = math.exp %131 : vector<8x32xf32>
    %cst_27 = arith.constant 1.000000e+00 : f32
    %133 = vector.broadcast %cst_27 : f32 to vector<8x32xf32>
    %134 = arith.addf %133, %132 : vector<8x32xf32>
    %135 = arith.divf %133, %134 : vector<8x32xf32>
    %136 = vector.extract_strided_slice %123 {offsets = [0, 64], sizes = [8, 32], strides = [1, 1]} : vector<8x128xf32> to vector<8x32xf32>
    %137 = math.tanh %136 : vector<8x32xf32>
    %138 = vector.extract_strided_slice %123 {offsets = [0, 96], sizes = [8, 32], strides = [1, 1]} : vector<8x128xf32> to vector<8x32xf32>
    %139 = arith.negf %138 : vector<8x32xf32>
    %140 = math.exp %139 : vector<8x32xf32>
    %cst_28 = arith.constant 1.000000e+00 : f32
    %141 = vector.broadcast %cst_28 : f32 to vector<8x32xf32>
    %142 = arith.addf %141, %140 : vector<8x32xf32>
    %143 = arith.divf %141, %142 : vector<8x32xf32>
    %144 = arith.mulf %135, %118 : vector<8x32xf32>
    %145 = arith.mulf %129, %137 : vector<8x32xf32>
    %146 = arith.addf %144, %145 : vector<8x32xf32>
    %147 = math.tanh %146 : vector<8x32xf32>
    %148 = arith.mulf %143, %147 : vector<8x32xf32>
    %149 = vector.extract_strided_slice %5 {offsets = [40, 0], sizes = [8, 128], strides = [1, 1]} : vector<64x128xf32> to vector<8x128xf32>
    %cst_29 = arith.constant dense<0.000000e+00> : vector<8x128xf32>
    %150 = tpu.matmul %148, %6, %cst_29 {dimension_numbers = #tpu.dot_dimension_numbers<[1], [0], [0], [1], [0, 0, 1, 1], [], []>} : vector<8x32xf32>, vector<32x128xf32>, vector<8x128xf32> -> vector<8x128xf32>
    %151 = arith.addf %149, %150 : vector<8x128xf32>
    %152 = vector.extract_strided_slice %151 {offsets = [0, 0], sizes = [8, 32], strides = [1, 1]} : vector<8x128xf32> to vector<8x32xf32>
    %153 = arith.negf %152 : vector<8x32xf32>
    %154 = math.exp %153 : vector<8x32xf32>
    %cst_30 = arith.constant 1.000000e+00 : f32
    %155 = vector.broadcast %cst_30 : f32 to vector<8x32xf32>
    %156 = arith.addf %155, %154 : vector<8x32xf32>
    %157 = arith.divf %155, %156 : vector<8x32xf32>
    %158 = vector.extract_strided_slice %151 {offsets = [0, 32], sizes = [8, 32], strides = [1, 1]} : vector<8x128xf32> to vector<8x32xf32>
    %159 = arith.negf %158 : vector<8x32xf32>
    %160 = math.exp %159 : vector<8x32xf32>
    %cst_31 = arith.constant 1.000000e+00 : f32
    %161 = vector.broadcast %cst_31 : f32 to vector<8x32xf32>
    %162 = arith.addf %161, %160 : vector<8x32xf32>
    %163 = arith.divf %161, %162 : vector<8x32xf32>
    %164 = vector.extract_strided_slice %151 {offsets = [0, 64], sizes = [8, 32], strides = [1, 1]} : vector<8x128xf32> to vector<8x32xf32>
    %165 = math.tanh %164 : vector<8x32xf32>
    %166 = vector.extract_strided_slice %151 {offsets = [0, 96], sizes = [8, 32], strides = [1, 1]} : vector<8x128xf32> to vector<8x32xf32>
    %167 = arith.negf %166 : vector<8x32xf32>
    %168 = math.exp %167 : vector<8x32xf32>
    %cst_32 = arith.constant 1.000000e+00 : f32
    %169 = vector.broadcast %cst_32 : f32 to vector<8x32xf32>
    %170 = arith.addf %169, %168 : vector<8x32xf32>
    %171 = arith.divf %169, %170 : vector<8x32xf32>
    %172 = arith.mulf %163, %146 : vector<8x32xf32>
    %173 = arith.mulf %157, %165 : vector<8x32xf32>
    %174 = arith.addf %172, %173 : vector<8x32xf32>
    %175 = math.tanh %174 : vector<8x32xf32>
    %176 = arith.mulf %171, %175 : vector<8x32xf32>
    %177 = vector.extract_strided_slice %5 {offsets = [48, 0], sizes = [8, 128], strides = [1, 1]} : vector<64x128xf32> to vector<8x128xf32>
    %cst_33 = arith.constant dense<0.000000e+00> : vector<8x128xf32>
    %178 = tpu.matmul %176, %6, %cst_33 {dimension_numbers = #tpu.dot_dimension_numbers<[1], [0], [0], [1], [0, 0, 1, 1], [], []>} : vector<8x32xf32>, vector<32x128xf32>, vector<8x128xf32> -> vector<8x128xf32>
    %179 = arith.addf %177, %178 : vector<8x128xf32>
    %180 = vector.extract_strided_slice %179 {offsets = [0, 0], sizes = [8, 32], strides = [1, 1]} : vector<8x128xf32> to vector<8x32xf32>
    %181 = arith.negf %180 : vector<8x32xf32>
    %182 = math.exp %181 : vector<8x32xf32>
    %cst_34 = arith.constant 1.000000e+00 : f32
    %183 = vector.broadcast %cst_34 : f32 to vector<8x32xf32>
    %184 = arith.addf %183, %182 : vector<8x32xf32>
    %185 = arith.divf %183, %184 : vector<8x32xf32>
    %186 = vector.extract_strided_slice %179 {offsets = [0, 32], sizes = [8, 32], strides = [1, 1]} : vector<8x128xf32> to vector<8x32xf32>
    %187 = arith.negf %186 : vector<8x32xf32>
    %188 = math.exp %187 : vector<8x32xf32>
    %cst_35 = arith.constant 1.000000e+00 : f32
    %189 = vector.broadcast %cst_35 : f32 to vector<8x32xf32>
    %190 = arith.addf %189, %188 : vector<8x32xf32>
    %191 = arith.divf %189, %190 : vector<8x32xf32>
    %192 = vector.extract_strided_slice %179 {offsets = [0, 64], sizes = [8, 32], strides = [1, 1]} : vector<8x128xf32> to vector<8x32xf32>
    %193 = math.tanh %192 : vector<8x32xf32>
    %194 = vector.extract_strided_slice %179 {offsets = [0, 96], sizes = [8, 32], strides = [1, 1]} : vector<8x128xf32> to vector<8x32xf32>
    %195 = arith.negf %194 : vector<8x32xf32>
    %196 = math.exp %195 : vector<8x32xf32>
    %cst_36 = arith.constant 1.000000e+00 : f32
    %197 = vector.broadcast %cst_36 : f32 to vector<8x32xf32>
    %198 = arith.addf %197, %196 : vector<8x32xf32>
    %199 = arith.divf %197, %198 : vector<8x32xf32>
    %200 = arith.mulf %191, %174 : vector<8x32xf32>
    %201 = arith.mulf %185, %193 : vector<8x32xf32>
    %202 = arith.addf %200, %201 : vector<8x32xf32>
    %203 = math.tanh %202 : vector<8x32xf32>
    %204 = arith.mulf %199, %203 : vector<8x32xf32>
    %205 = vector.extract_strided_slice %5 {offsets = [56, 0], sizes = [8, 128], strides = [1, 1]} : vector<64x128xf32> to vector<8x128xf32>
    %cst_37 = arith.constant dense<0.000000e+00> : vector<8x128xf32>
    %206 = tpu.matmul %204, %6, %cst_37 {dimension_numbers = #tpu.dot_dimension_numbers<[1], [0], [0], [1], [0, 0, 1, 1], [], []>} : vector<8x32xf32>, vector<32x128xf32>, vector<8x128xf32> -> vector<8x128xf32>
    %207 = arith.addf %205, %206 : vector<8x128xf32>
    %208 = vector.extract_strided_slice %207 {offsets = [0, 0], sizes = [8, 32], strides = [1, 1]} : vector<8x128xf32> to vector<8x32xf32>
    %209 = arith.negf %208 : vector<8x32xf32>
    %210 = math.exp %209 : vector<8x32xf32>
    %cst_38 = arith.constant 1.000000e+00 : f32
    %211 = vector.broadcast %cst_38 : f32 to vector<8x32xf32>
    %212 = arith.addf %211, %210 : vector<8x32xf32>
    %213 = arith.divf %211, %212 : vector<8x32xf32>
    %214 = vector.extract_strided_slice %207 {offsets = [0, 32], sizes = [8, 32], strides = [1, 1]} : vector<8x128xf32> to vector<8x32xf32>
    %215 = arith.negf %214 : vector<8x32xf32>
    %216 = math.exp %215 : vector<8x32xf32>
    %cst_39 = arith.constant 1.000000e+00 : f32
    %217 = vector.broadcast %cst_39 : f32 to vector<8x32xf32>
    %218 = arith.addf %217, %216 : vector<8x32xf32>
    %219 = arith.divf %217, %218 : vector<8x32xf32>
    %220 = vector.extract_strided_slice %207 {offsets = [0, 64], sizes = [8, 32], strides = [1, 1]} : vector<8x128xf32> to vector<8x32xf32>
    %221 = math.tanh %220 : vector<8x32xf32>
    %222 = vector.extract_strided_slice %207 {offsets = [0, 96], sizes = [8, 32], strides = [1, 1]} : vector<8x128xf32> to vector<8x32xf32>
    %223 = arith.negf %222 : vector<8x32xf32>
    %224 = math.exp %223 : vector<8x32xf32>
    %cst_40 = arith.constant 1.000000e+00 : f32
    %225 = vector.broadcast %cst_40 : f32 to vector<8x32xf32>
    %226 = arith.addf %225, %224 : vector<8x32xf32>
    %227 = arith.divf %225, %226 : vector<8x32xf32>
    %228 = arith.mulf %219, %202 : vector<8x32xf32>
    %229 = arith.mulf %213, %221 : vector<8x32xf32>
    %230 = arith.addf %228, %229 : vector<8x32xf32>
    %231 = math.tanh %230 : vector<8x32xf32>
    %232 = arith.mulf %227, %231 : vector<8x32xf32>
    %c0_41 = arith.constant 0 : index
    %c0_42 = arith.constant 0 : index
    %233 = vector.load %arg4[%c0_41, %c0_42] : memref<32x32xf32, #tpu.memory_space<vmem>>, vector<32x32xf32>
    %cst_43 = arith.constant dense<0.000000e+00> : vector<8x32xf32>
    %234 = tpu.matmul %232, %233, %cst_43 {dimension_numbers = #tpu.dot_dimension_numbers<[1], [0], [0], [1], [0, 0, 1, 1], [], []>} : vector<8x32xf32>, vector<32x32xf32>, vector<8x32xf32> -> vector<8x32xf32>
    %c0_44 = arith.constant 0 : index
    %c0_45 = arith.constant 0 : index
    %235 = vector.load %arg5[%c0_44, %c0_45] : memref<1x32xf32, #tpu.memory_space<vmem>>, vector<1x32xf32>
    %236 = vector.broadcast %235 : vector<1x32xf32> to vector<8x32xf32>
    %237 = arith.addf %234, %236 : vector<8x32xf32>
    %cst_46 = arith.constant 0.000000e+00 : f32
    %238 = vector.broadcast %cst_46 : f32 to vector<8x32xf32>
    %239 = arith.maximumf %237, %238 : vector<8x32xf32>
    %c0_47 = arith.constant 0 : index
    %c0_48 = arith.constant 0 : index
    %240 = vector.load %arg6[%c0_47, %c0_48] : memref<32x32xf32, #tpu.memory_space<vmem>>, vector<32x32xf32>
    %cst_49 = arith.constant dense<0.000000e+00> : vector<8x32xf32>
    %241 = tpu.matmul %239, %240, %cst_49 {dimension_numbers = #tpu.dot_dimension_numbers<[1], [0], [0], [1], [0, 0, 1, 1], [], []>} : vector<8x32xf32>, vector<32x32xf32>, vector<8x32xf32> -> vector<8x32xf32>
    %c0_50 = arith.constant 0 : index
    %c0_51 = arith.constant 0 : index
    %242 = vector.load %arg7[%c0_50, %c0_51] : memref<1x32xf32, #tpu.memory_space<vmem>>, vector<1x32xf32>
    %243 = vector.broadcast %242 : vector<1x32xf32> to vector<8x32xf32>
    %244 = arith.addf %241, %243 : vector<8x32xf32>
    %245 = vector.extract_strided_slice %244 {offsets = [0, 0], sizes = [8, 16], strides = [1, 1]} : vector<8x32xf32> to vector<8x16xf32>
    %246 = vector.extract_strided_slice %244 {offsets = [0, 16], sizes = [8, 16], strides = [1, 1]} : vector<8x32xf32> to vector<8x16xf32>
    %cst_52 = arith.constant 5.000000e-01 : f32
    %247 = vector.broadcast %cst_52 : f32 to vector<8x16xf32>
    %248 = arith.mulf %247, %246 : vector<8x16xf32>
    %249 = math.exp %248 : vector<8x16xf32>
    %c0_53 = arith.constant 0 : index
    %c0_54 = arith.constant 0 : index
    %250 = vector.load %arg12[%c0_53, %c0_54] : memref<8x16xf32, #tpu.memory_space<vmem>>, vector<8x16xf32>
    %251 = arith.mulf %250, %249 : vector<8x16xf32>
    %252 = arith.addf %245, %251 : vector<8x16xf32>
    %253 = math.exp %246 : vector<8x16xf32>
    %254 = arith.mulf %245, %245 : vector<8x16xf32>
    %255 = arith.addf %253, %254 : vector<8x16xf32>
    %256 = arith.subf %255, %246 : vector<8x16xf32>
    %cst_55 = arith.constant 1.000000e+00 : f32
    %257 = vector.broadcast %cst_55 : f32 to vector<8x16xf32>
    %258 = arith.subf %256, %257 : vector<8x16xf32>
    %cst_56 = arith.constant dense<0.000000e+00> : vector<8xf32>
    %259 = vector.multi_reduction <add>, %258, %cst_56 [1] : vector<8x16xf32> to vector<8xf32>
    %260 = vector.shape_cast %259 : vector<8xf32> to vector<8x1xf32>
    %cst_57 = arith.constant 5.000000e-01 : f32
    %261 = vector.broadcast %cst_57 : f32 to vector<8x1xf32>
    %262 = arith.mulf %261, %260 : vector<8x1xf32>
    %c0_58 = arith.constant 0 : index
    %c0_59 = arith.constant 0 : index
    %263 = vector.load %arg8[%c0_58, %c0_59] : memref<16x32xf32, #tpu.memory_space<vmem>>, vector<16x32xf32>
    %cst_60 = arith.constant dense<0.000000e+00> : vector<8x32xf32>
    %264 = tpu.matmul %252, %263, %cst_60 {dimension_numbers = #tpu.dot_dimension_numbers<[1], [0], [0], [1], [0, 0, 1, 1], [], []>} : vector<8x16xf32>, vector<16x32xf32>, vector<8x32xf32> -> vector<8x32xf32>
    %c0_61 = arith.constant 0 : index
    %c0_62 = arith.constant 0 : index
    %265 = vector.load %arg9[%c0_61, %c0_62] : memref<1x32xf32, #tpu.memory_space<vmem>>, vector<1x32xf32>
    %266 = vector.broadcast %265 : vector<1x32xf32> to vector<8x32xf32>
    %267 = arith.addf %264, %266 : vector<8x32xf32>
    %cst_63 = arith.constant 0.000000e+00 : f32
    %268 = vector.broadcast %cst_63 : f32 to vector<8x32xf32>
    %269 = arith.maximumf %267, %268 : vector<8x32xf32>
    %c0_64 = arith.constant 0 : index
    %c0_65 = arith.constant 0 : index
    %270 = vector.load %arg10[%c0_64, %c0_65] : memref<32x8xf32, #tpu.memory_space<vmem>>, vector<32x8xf32>
    %cst_66 = arith.constant dense<0.000000e+00> : vector<8x8xf32>
    %271 = tpu.matmul %269, %270, %cst_66 {dimension_numbers = #tpu.dot_dimension_numbers<[1], [0], [0], [1], [0, 0, 1, 1], [], []>} : vector<8x32xf32>, vector<32x8xf32>, vector<8x8xf32> -> vector<8x8xf32>
    %c0_67 = arith.constant 0 : index
    %c0_68 = arith.constant 0 : index
    %272 = vector.load %arg11[%c0_67, %c0_68] : memref<1x8xf32, #tpu.memory_space<vmem>>, vector<1x8xf32>
    %273 = vector.broadcast %272 : vector<1x8xf32> to vector<8x8xf32>
    %274 = arith.addf %271, %273 : vector<8x8xf32>
    %c0_69 = arith.constant 0 : index
    %c0_70 = arith.constant 0 : index
    %275 = vector.load %arg13[%c0_69, %c0_70] : memref<8x16xf32, #tpu.memory_space<vmem>>, vector<8x16xf32>
    tpu.vector_store %arg13[%c0_69, %c0_70], %252 {strides = array<i32>} : memref<8x16xf32, #tpu.memory_space<vmem>>, vector<8x16xf32>,
    %c0_71 = arith.constant 0 : index
    %c0_72 = arith.constant 0 : index
    %276 = vector.load %arg14[%c0_71, %c0_72] : memref<8x8xf32, #tpu.memory_space<vmem>>, vector<8x8xf32>
    tpu.vector_store %arg14[%c0_71, %c0_72], %274 {strides = array<i32>} : memref<8x8xf32, #tpu.memory_space<vmem>>, vector<8x8xf32>,
    %c0_73 = arith.constant 0 : index
    %c0_74 = arith.constant 0 : index
    %277 = vector.load %arg15[%c0_73, %c0_74] : memref<8x1xf32, #tpu.memory_space<vmem>>, vector<8x1xf32>
    tpu.vector_store %arg15[%c0_73, %c0_74], %262 {strides = array<i32>} : memref<8x1xf32, #tpu.memory_space<vmem>>, vector<8x1xf32>,
    return
  }
}

</mosaic_0001>

<llo_original>
// kernel: tpu_custom_call.1
$region0: #{tpu_custom_call.1}
  #allocation0 [shape = 'u32[]', space=smem, size = 0x4, offset = 0x4, fixed_abs, tag = 'smem constant byte address 0x4 - core index']
  #allocation1 [shape = 'u32[72,128]{1,0:T(1,128)}', space=vmem, size = 0x9000, scoped, tag = 'internal scratch']
  %s0 = inlined_call_operand.vmem [shape: f32[64,16], index: 0, kind: input, shape index: {}]
  %s1 = inlined_call_operand.hbm [shape: f32[16,128], index: 1, kind: input, shape index: {}]
  %s2 = inlined_call_operand.vmem [shape: f32[32,128], index: 2, kind: input, shape index: {}]
  %s3 = inlined_call_operand.vmem [shape: f32[1,128], index: 3, kind: input, shape index: {}]
  %s4 = inlined_call_operand.vmem [shape: f32[32,32], index: 4, kind: input, shape index: {}]
  %s5 = inlined_call_operand.hbm [shape: f32[1,32], index: 5, kind: input, shape index: {}]
  %s6 = inlined_call_operand.vmem [shape: f32[32,32], index: 6, kind: input, shape index: {}]
  %s7 = inlined_call_operand.hbm [shape: f32[1,32], index: 7, kind: input, shape index: {}]
  %s8 = inlined_call_operand.hbm [shape: f32[16,32], index: 8, kind: input, shape index: {}]
  %s9 = inlined_call_operand.hbm [shape: f32[1,32], index: 9, kind: input, shape index: {}]
  %s10 = inlined_call_operand.vmem [shape: f32[32,8], index: 10, kind: input, shape index: {}]
  %s11 = inlined_call_operand.hbm [shape: f32[1,8], index: 11, kind: input, shape index: {}]
  %s12 = inlined_call_operand.vmem [shape: f32[8,16], index: 12, kind: input, shape index: {}]
  %s13 = inlined_call_operand.hbm [shape: f32[8,16], index: 13, kind: output, shape index: {0}]
  %s14 = inlined_call_operand.hbm [shape: f32[8,8], index: 14, kind: output, shape index: {1}]
  %s15 = inlined_call_operand.vmem [shape: f32[8,1], index: 15, kind: output, shape index: {2}]
  %16 = xla_tuple %s13, %s14, %s15
  %s17 = sld [smem:[#allocation0]]
  $region102: #{tpu_custom_call.1} parent=0
    _
  %s19 = ssub.s32 1, %s17
  %s20 = scalar_select 0, %s19, %s17
  $region1: #{tpu_custom_call.1} parent=0
    #allocation2 [shape = 'u8[8192]{0}', space=vmem, size = 0x2000, scoped, tag = 'input window, operand 1, single buffered']
    #allocation3 [shape = 's32[1]{0}', space=sflag, size = 0x4, scoped, tag = 'scoped memory for tpu_custom_call.1']
    #allocation4 [shape = 's32[1]{0}', space=sflag, size = 0x4, scoped, tag = 'scoped memory for tpu_custom_call.1']
    #allocation5 [shape = 'u8[512]{0}', space=vmem, size = 0x400, scoped, tag = 'input window, operand 5, single buffered']
    #allocation6 [shape = 's32[1]{0}', space=sflag, size = 0x4, scoped, tag = 'scoped memory for tpu_custom_call.1']
    #allocation7 [shape = 'u8[512]{0}', space=vmem, size = 0x400, scoped, tag = 'input window, operand 7, single buffered']
    #allocation8 [shape = 'u8[8192]{0}', space=vmem, size = 0x2000, scoped, tag = 'input window, operand 8, single buffered']
    #allocation9 [shape = 's32[1]{0}', space=sflag, size = 0x4, scoped, tag = 'scoped memory for tpu_custom_call.1']
    #allocation10 [shape = 'u8[512]{0}', space=vmem, size = 0x400, scoped, tag = 'input window, operand 9, single buffered']
    #allocation11 [shape = 'u8[512]{0}', space=vmem, size = 0x400, scoped, tag = 'input window, operand 11, single buffered']
    #allocation12 [shape = 's32[1]{0}', space=sflag, size = 0x4, scoped, tag = 'scoped memory for tpu_custom_call.1']
    #allocation13 [shape = 'u8[4096]{0}', space=vmem, size = 0x1000, scoped, tag = 'output window, operand 0, single buffered']
    #allocation14 [shape = 'u8[4096]{0}', space=vmem, size = 0x1000, scoped, tag = 'output window, operand 1, single buffered']
    #allocation15 [shape = 's32[1]{0}', space=sflag, size = 0x4, scoped, tag = 'scoped memory for tpu_custom_call.1']
    %21 = vsyncpa [#allocation3], 0
    %22 = vsyncpa [#allocation6], 0
    %23 = vsyncpa [#allocation9], 0
    %24 = vsyncpa [#allocation12], 0
    %25 = vsyncpa [#allocation4], 0
    %26 = vsyncpa [#allocation15], 0
    // Predicated region
    $region2: #{tpu_custom_call.1} parent=1 // pred_check
      _
    $region3: #{tpu_custom_call.1} parent=1 // pred_check_branch
      %28 = sbr.rel (0) target = $region5
    $region4: #{tpu_custom_call.1} parent=1 // pred_region
      _
    $region5: #{tpu_custom_call.1} parent=1 // pred_fallthru
      _
    // Predicated region
    $region6: #{tpu_custom_call.1} parent=1 // pred_check
      _
    $region7: #{tpu_custom_call.1} parent=1 // pred_check_branch
      %30 = sbr.rel (0) target = $region9
    $region8: #{tpu_custom_call.1} parent=1 // pred_region
      %32 = vsyncadd [#allocation3], 0
      %s33 = sshll.u32 %s1, 4
      %s34 = int_to_ptr.hbm [resolvable:$true] %s33
      %s35 = sshll.u32 [#allocation2], 4
      %s36 = int_to_ptr.vmem [resolvable:$true] %s35
      %41 = dma.hbm_to_vmem [thread:$0]  %s34, 256, %s36, [#allocation3], 128, 128, 8
    $region9: #{tpu_custom_call.1} parent=1 // pred_fallthru
      _
    // Predicated region
    $region10: #{tpu_custom_call.1} parent=1 // pred_check
      _
    $region11: #{tpu_custom_call.1} parent=1 // pred_check_branch
      %43 = sbr.rel (0) target = $region13
    $region12: #{tpu_custom_call.1} parent=1 // pred_region
      _
    $region13: #{tpu_custom_call.1} parent=1 // pred_fallthru
      _
    // Predicated region
    $region14: #{tpu_custom_call.1} parent=1 // pred_check
      _
    $region15: #{tpu_custom_call.1} parent=1 // pred_check_branch
      %45 = sbr.rel (0) target = $region17
    $region16: #{tpu_custom_call.1} parent=1 // pred_region
      _
    $region17: #{tpu_custom_call.1} parent=1 // pred_fallthru
      _
    // Predicated region
    $region18: #{tpu_custom_call.1} parent=1 // pred_check
      _
    $region19: #{tpu_custom_call.1} parent=1 // pred_check_branch
      %47 = sbr.rel (0) target = $region21
    $region20: #{tpu_custom_call.1} parent=1 // pred_region
      _
    $region21: #{tpu_custom_call.1} parent=1 // pred_fallthru
      _
    // Predicated region
    $region22: #{tpu_custom_call.1} parent=1 // pred_check
      _
    $region23: #{tpu_custom_call.1} parent=1 // pred_check_branch
      %49 = sbr.rel (0) target = $region25
    $region24: #{tpu_custom_call.1} parent=1 // pred_region
      %51 = vsyncadd [#allocation6], 0
      %s53 = sshll.u32 %s5, 4
      %s54 = int_to_ptr.hbm [resolvable:$true] %s53
      %s55 = sshll.u32 [#allocation5], 4
      %s56 = int_to_ptr.vmem [resolvable:$true] %s55
      %58 = dma.hbm_to_vmem [thread:$0]  %s54, 16, %s56, [#allocation6]
    $region25: #{tpu_custom_call.1} parent=1 // pred_fallthru
      _
    // Predicated region
    $region26: #{tpu_custom_call.1} parent=1 // pred_check
      _
    $region27: #{tpu_custom_call.1} parent=1 // pred_check_branch
      %60 = sbr.rel (0) target = $region29
    $region28: #{tpu_custom_call.1} parent=1 // pred_region
      _
    $region29: #{tpu_custom_call.1} parent=1 // pred_fallthru
      _
    // Predicated region
    $region30: #{tpu_custom_call.1} parent=1 // pred_check
      _
    $region31: #{tpu_custom_call.1} parent=1 // pred_check_branch
      %62 = sbr.rel (0) target = $region33
    $region32: #{tpu_custom_call.1} parent=1 // pred_region
      %64 = vsyncadd [#allocation6], 0
      %s66 = sshll.u32 %s7, 4
      %s67 = int_to_ptr.hbm [resolvable:$true] %s66
      %s68 = sshll.u32 [#allocation7], 4
      %s69 = int_to_ptr.vmem [resolvable:$true] %s68
      %71 = dma.hbm_to_vmem [thread:$0]  %s67, 16, %s69, [#allocation6]
    $region33: #{tpu_custom_call.1} parent=1 // pred_fallthru
      _
    // Predicated region
    $region34: #{tpu_custom_call.1} parent=1 // pred_check
      _
    $region35: #{tpu_custom_call.1} parent=1 // pred_check_branch
      %73 = sbr.rel (0) target = $region37
    $region36: #{tpu_custom_call.1} parent=1 // pred_region
      %75 = vsyncadd [#allocation9], 0
      %s76 = sshll.u32 %s8, 4
      %s77 = int_to_ptr.hbm [resolvable:$true] %s76
      %s78 = sshll.u32 [#allocation8], 4
      %s79 = int_to_ptr.vmem [resolvable:$true] %s78
      %84 = dma.hbm_to_vmem [thread:$0]  %s77, 256, %s79, [#allocation9], 128, 128, 8
    $region37: #{tpu_custom_call.1} parent=1 // pred_fallthru
      _
    // Predicated region
    $region38: #{tpu_custom_call.1} parent=1 // pred_check
      _
    $region39: #{tpu_custom_call.1} parent=1 // pred_check_branch
      %86 = sbr.rel (0) target = $region41
    $region40: #{tpu_custom_call.1} parent=1 // pred_region
      %88 = vsyncadd [#allocation9], 0
      %s90 = sshll.u32 %s9, 4
      %s91 = int_to_ptr.hbm [resolvable:$true] %s90
      %s92 = sshll.u32 [#allocation10], 4
      %s93 = int_to_ptr.vmem [resolvable:$true] %s92
      %95 = dma.hbm_to_vmem [thread:$0]  %s91, 16, %s93, [#allocation9]
    $region41: #{tpu_custom_call.1} parent=1 // pred_fallthru
      _
    // Predicated region
    $region42: #{tpu_custom_call.1} parent=1 // pred_check
      _
    $region43: #{tpu_custom_call.1} parent=1 // pred_check_branch
      %97 = sbr.rel (0) target = $region45
    $region44: #{tpu_custom_call.1} parent=1 // pred_region
      _
    $region45: #{tpu_custom_call.1} parent=1 // pred_fallthru
      _
    // Predicated region
    $region46: #{tpu_custom_call.1} parent=1 // pred_check
      _
    $region47: #{tpu_custom_call.1} parent=1 // pred_check_branch
      %99 = sbr.rel (0) target = $region49
    $region48: #{tpu_custom_call.1} parent=1 // pred_region
      %101 = vsyncadd [#allocation12], 0
      %s103 = sshll.u32 %s11, 4
      %s104 = int_to_ptr.hbm [resolvable:$true] %s103
      %s105 = sshll.u32 [#allocation11], 4
      %s106 = int_to_ptr.vmem [resolvable:$true] %s105
      %108 = dma.hbm_to_vmem [thread:$0]  %s104, 16, %s106, [#allocation12]
    $region49: #{tpu_custom_call.1} parent=1 // pred_fallthru
      _
    // Predicated region
    $region50: #{tpu_custom_call.1} parent=1 // pred_check
      _
    $region51: #{tpu_custom_call.1} parent=1 // pred_check_branch
      %110 = sbr.rel (0) target = $region53
    $region52: #{tpu_custom_call.1} parent=1 // pred_region
      _
    $region53: #{tpu_custom_call.1} parent=1 // pred_fallthru
      _
    // Predicated region
    $region54: #{tpu_custom_call.1} parent=1 // pred_check
      _
    $region55: #{tpu_custom_call.1} parent=1 // pred_check_branch
      %112 = sbr.rel (0) target = $region57
    $region56: #{tpu_custom_call.1} parent=1 // pred_region
      %114 = dma.done [#allocation3], 256
    $region57: #{tpu_custom_call.1} parent=1 // pred_fallthru
      _
    // Predicated region
    $region58: #{tpu_custom_call.1} parent=1 // pred_check
      _
    $region59: #{tpu_custom_call.1} parent=1 // pred_check_branch
      %116 = sbr.rel (0) target = $region61
    $region60: #{tpu_custom_call.1} parent=1 // pred_region
      %118 = dma.done [#allocation6], 16
    $region61: #{tpu_custom_call.1} parent=1 // pred_fallthru
      _
    // Predicated region
    $region62: #{tpu_custom_call.1} parent=1 // pred_check
      _
    $region63: #{tpu_custom_call.1} parent=1 // pred_check_branch
      %120 = sbr.rel (0) target = $region65
    $region64: #{tpu_custom_call.1} parent=1 // pred_region
      %122 = dma.done [#allocation6], 16
    $region65: #{tpu_custom_call.1} parent=1 // pred_fallthru
      _
    // Predicated region
    $region66: #{tpu_custom_call.1} parent=1 // pred_check
      _
    $region67: #{tpu_custom_call.1} parent=1 // pred_check_branch
      %124 = sbr.rel (0) target = $region69
    $region68: #{tpu_custom_call.1} parent=1 // pred_region
      %126 = dma.done [#allocation9], 256
    $region69: #{tpu_custom_call.1} parent=1 // pred_fallthru
      _
    // Predicated region
    $region70: #{tpu_custom_call.1} parent=1 // pred_check
      _
    $region71: #{tpu_custom_call.1} parent=1 // pred_check_branch
      %128 = sbr.rel (0) target = $region73
    $region72: #{tpu_custom_call.1} parent=1 // pred_region
      %130 = dma.done [#allocation9], 16
    $region73: #{tpu_custom_call.1} parent=1 // pred_fallthru
      _
    // Predicated region
    $region74: #{tpu_custom_call.1} parent=1 // pred_check
      _
    $region75: #{tpu_custom_call.1} parent=1 // pred_check_branch
      %132 = sbr.rel (0) target = $region77
    $region76: #{tpu_custom_call.1} parent=1 // pred_region
      %134 = dma.done [#allocation12], 16
    $region77: #{tpu_custom_call.1} parent=1 // pred_fallthru
      _
    %v135 = vld [vmem:[%s0] sm:$0xff]
    %v136 = vld [vmem:[%s0 + $0x8] sm:$0xff]
    %v137 = vld [vmem:[%s0 + $0x10] sm:$0xff]
    %v138 = vld [vmem:[%s0 + $0x18] sm:$0xff]
    %v139 = vld [vmem:[%s0 + $0x20] sm:$0xff]
    %v140 = vld [vmem:[%s0 + $0x28] sm:$0xff]
    %v141 = vld [vmem:[%s0 + $0x30] sm:$0xff]
    %v142 = vld [vmem:[%s0 + $0x38] sm:$0xff]
    %v143 = vld [vmem:[#allocation2] sm:$0xff]
    %v144 = vld [vmem:[#allocation2 + $0x8] sm:$0xff]
    %v145 = vld [vmem:[%s3] sm:$0x1]
    %v147 = vperm.slane %v145, 0
    %vm149 = vcmask 130048
    %v151 = vsel %vm149, %v135, 0
    %v154 = vsel %vm149, %v136, 0
    %v157 = vsel %vm149, %v137, 0
    %v160 = vsel %vm149, %v138, 0
    %v163 = vsel %vm149, %v139, 0
    %v166 = vsel %vm149, %v140, 0
    %v169 = vsel %vm149, %v141, 0
    %v172 = vsel %vm149, %v142, 0
    %174 = vmatpush.msra.mxu0 0.0
    %175 = vmatpush.msra.mxu0 0.0
    %176 = vmatpush.msra.mxu0 0.0
    %177 = vmatpush.msra.mxu0 0.0
    %178 = vmatpush.msra.mxu0 0.0
    %179 = vmatpush.msra.mxu0 0.0
    %180 = vmatpush.msra.mxu0 0.0
    %181 = vmatpush.msra.mxu0 0.0
    %182 = vmatpush.msra.mxu0 0.0
    %183 = vmatpush.msra.mxu0 0.0
    %184 = vmatpush.msra.mxu0 0.0
    %185 = vmatpush.msra.mxu0 0.0
    %186 = vmatpush.msra.mxu0 0.0
    %187 = vmatpush.msra.mxu0 0.0
    %188 = vmatpush.msra.mxu0 %v144
    %189 = vmatpush.msra.mxu0 %v143
    %190 = vmatmul.f32.gmra.mxu0 %v151
    %v191 = vpop.f32.mrf.mxu0
    %v192 = vadd.f32 %v147, %v191
    %193 = vmatmul.f32.gmra.mxu0 %v154
    %v194 = vpop.f32.mrf.mxu0
    %v195 = vadd.f32 %v147, %v194
    %196 = vmatmul.f32.gmra.mxu0 %v157
    %v197 = vpop.f32.mrf.mxu0
    %v198 = vadd.f32 %v147, %v197
    %199 = vmatmul.f32.gmra.mxu0 %v160
    %v200 = vpop.f32.mrf.mxu0
    %v201 = vadd.f32 %v147, %v200
    %202 = vmatmul.f32.gmra.mxu0 %v163
    %v203 = vpop.f32.mrf.mxu0
    %v204 = vadd.f32 %v147, %v203
    %205 = vmatmul.f32.gmra.mxu0 %v166
    %v206 = vpop.f32.mrf.mxu0
    %v207 = vadd.f32 %v147, %v206
    %208 = vmatmul.f32.gmra.mxu0 %v169
    %v209 = vpop.f32.mrf.mxu0
    %v210 = vadd.f32 %v147, %v209
    %211 = vmatmul.f32.gmra.mxu0 %v172
    %v212 = vpop.f32.mrf.mxu0
    %v213 = vadd.f32 %v147, %v212
    %214 = vdwg.mxu0
    %v215 = vld [vmem:[%s2] sm:$0xff]
    %v216 = vld [vmem:[%s2 + $0x8] sm:$0xff]
    %v217 = vld [vmem:[%s2 + $0x10] sm:$0xff]
    %v218 = vld [vmem:[%s2 + $0x18] sm:$0xff]
    %vm219 = vcmask 261120
    %v221 = vsel %vm219, 0.0, 0
    %223 = vmatpush.msra.mxu0 0.0
    %224 = vmatpush.msra.mxu0 0.0
    %225 = vmatpush.msra.mxu0 0.0
    %226 = vmatpush.msra.mxu0 0.0
    %227 = vmatpush.msra.mxu0 0.0
    %228 = vmatpush.msra.mxu0 0.0
    %229 = vmatpush.msra.mxu0 0.0
    %230 = vmatpush.msra.mxu0 0.0
    %231 = vmatpush.msra.mxu0 0.0
    %232 = vmatpush.msra.mxu0 0.0
    %233 = vmatpush.msra.mxu0 0.0
    %234 = vmatpush.msra.mxu0 0.0
    %235 = vmatpush.msra.mxu0 %v218
    %236 = vmatpush.msra.mxu0 %v217
    %237 = vmatpush.msra.mxu0 %v216
    %238 = vmatpush.msra.mxu0 %v215
    %239 = vmatmul.f32.gmra.mxu0 %v221
    %v240 = vpop.f32.mrf.mxu0
    %v241 = vadd.f32 0.0, %v240
    %242 = vdwg.mxu0
    %v243 = vadd.f32 %v192, %v241
    %v244 = vxor.u32 %v243, 2147483648
    %v245 = vmul.f32 %v244, 1.442695
    %v246 = vpow.pop %v245
    %v247 = vadd.f32 %v246, 1.0
    %v248 = vrcp.pop %v247
    %v249 = vmul.f32 %v247, %v248
    %v250 = vsub.f32 1.0, %v249
    %v251 = vmul.f32 %v248, %v250
    %v252 = vadd.f32 %v248, %v251
    %vm253 = vweird.f32 %v247
    %vm254 = vweird.f32 %v248
    %vm255 = vmor %vm253, %vm254
    %v256 = vsel %vm255, %v248, %v252
    %v257 = vand.u32 2147483647, %v247
    %vm258 = vcmp.eq.f32.partialorder %v257, 8.507059e+37
    %v259 = vand.u32 %v247, 2147483648
    %v260 = vor.u32 1.1754944e-38, %v259
    %v261 = vsel %vm258, %v260, %v256
    %v262 = vmul.f32 1.0, %v261
    %v263 = vtanh.pop %v243
    %v264 = vmul.f32 %v262, 0.0
    %266 = vrot.lane.b32.xlu0 %v263, 64
    %v267 = vpop.permute.xlu0 %266
    %v269 = vmul.f32 %v262, %v267
    %271 = vrot.lane.b32.xlu0 %v269, 32
    %v272 = vpop.permute.xlu0 %271
    %v274 = vadd.f32 %v264, %v272
    %v275 = vtanh.pop %v274
    %277 = vrot.lane.b32.xlu0 %v275, 64
    %v278 = vpop.permute.xlu0 %277
    %v280 = vmul.f32 %v262, %v278
    %282 = vrot.lane.b32.xlu0 %v280, 32
    %v283 = vpop.permute.xlu0 %282
    %v284 = vsel %vm219, %v283, 0
    %286 = vmatpush.msra.mxu0 0.0
    %287 = vmatpush.msra.mxu0 0.0
    %288 = vmatpush.msra.mxu0 0.0
    %289 = vmatpush.msra.mxu0 0.0
    %290 = vmatpush.msra.mxu0 0.0
    %291 = vmatpush.msra.mxu0 0.0
    %292 = vmatpush.msra.mxu0 0.0
    %293 = vmatpush.msra.mxu0 0.0
    %294 = vmatpush.msra.mxu0 0.0
    %295 = vmatpush.msra.mxu0 0.0
    %296 = vmatpush.msra.mxu0 0.0
    %297 = vmatpush.msra.mxu0 0.0
    %298 = vmatpush.msra.mxu0 %v218
    %299 = vmatpush.msra.mxu0 %v217
    %300 = vmatpush.msra.mxu0 %v216
    %301 = vmatpush.msra.mxu0 %v215
    %302 = vmatmul.f32.gmra.mxu0 %v284
    %v303 = vpop.f32.mrf.mxu0
    %v304 = vadd.f32 0.0, %v303
    %305 = vdwg.mxu0
    %v306 = vadd.f32 %v195, %v304
    %v307 = vxor.u32 %v306, 2147483648
    %v308 = vmul.f32 %v307, 1.442695
    %v309 = vpow.pop %v308
    %v310 = vadd.f32 %v309, 1.0
    %v311 = vrcp.pop %v310
    %v312 = vmul.f32 %v310, %v311
    %v313 = vsub.f32 1.0, %v312
    %v314 = vmul.f32 %v311, %v313
    %v315 = vadd.f32 %v311, %v314
    %vm316 = vweird.f32 %v310
    %vm317 = vweird.f32 %v311
    %vm318 = vmor %vm316, %vm317
    %v319 = vsel %vm318, %v311, %v315
    %v320 = vand.u32 2147483647, %v310
    %vm321 = vcmp.eq.f32.partialorder %v320, 8.507059e+37
    %v322 = vand.u32 %v310, 2147483648
    %v323 = vor.u32 1.1754944e-38, %v322
    %v324 = vsel %vm321, %v323, %v319
    %v325 = vmul.f32 1.0, %v324
    %v326 = vtanh.pop %v306
    %v327 = vmul.f32 %v325, %v274
    %329 = vrot.lane.b32.xlu0 %v326, 64
    %v330 = vpop.permute.xlu0 %329
    %v332 = vmul.f32 %v325, %v330
    %334 = vrot.lane.b32.xlu0 %v332, 32
    %v335 = vpop.permute.xlu0 %334
    %v337 = vadd.f32 %v327, %v335
    %v338 = vtanh.pop %v337
    %340 = vrot.lane.b32.xlu0 %v338, 64
    %v341 = vpop.permute.xlu0 %340
    %v343 = vmul.f32 %v325, %v341
    %345 = vrot.lane.b32.xlu0 %v343, 32
    %v346 = vpop.permute.xlu0 %345
    %v347 = vsel %vm219, %v346, 0
    %349 = vmatpush.msra.mxu0 0.0
    %350 = vmatpush.msra.mxu0 0.0
    %351 = vmatpush.msra.mxu0 0.0
    %352 = vmatpush.msra.mxu0 0.0
    %353 = vmatpush.msra.mxu0 0.0
    %354 = vmatpush.msra.mxu0 0.0
    %355 = vmatpush.msra.mxu0 0.0
    %356 = vmatpush.msra.mxu0 0.0
    %357 = vmatpush.msra.mxu0 0.0
    %358 = vmatpush.msra.mxu0 0.0
    %359 = vmatpush.msra.mxu0 0.0
    %360 = vmatpush.msra.mxu0 0.0
    %361 = vmatpush.msra.mxu0 %v218
    %362 = vmatpush.msra.mxu0 %v217
    %363 = vmatpush.msra.mxu0 %v216
    %364 = vmatpush.msra.mxu0 %v215
    %365 = vmatmul.f32.gmra.mxu0 %v347
    %v366 = vpop.f32.mrf.mxu0
    %v367 = vadd.f32 0.0, %v366
    %368 = vdwg.mxu0
    %v369 = vadd.f32 %v198, %v367
    %v370 = vxor.u32 %v369, 2147483648
    %v371 = vmul.f32 %v370, 1.442695
    %v372 = vpow.pop %v371
    %v373 = vadd.f32 %v372, 1.0
    %v374 = vrcp.pop %v373
    %v375 = vmul.f32 %v373, %v374
    %v376 = vsub.f32 1.0, %v375
    %v377 = vmul.f32 %v374, %v376
    %v378 = vadd.f32 %v374, %v377
    %vm379 = vweird.f32 %v373
    %vm380 = vweird.f32 %v374
    %vm381 = vmor %vm379, %vm380
    %v382 = vsel %vm381, %v374, %v378
    %v383 = vand.u32 2147483647, %v373
    %vm384 = vcmp.eq.f32.partialorder %v383, 8.507059e+37
    %v385 = vand.u32 %v373, 2147483648
    %v386 = vor.u32 1.1754944e-38, %v385
    %v387 = vsel %vm384, %v386, %v382
    %v388 = vmul.f32 1.0, %v387
    %v389 = vtanh.pop %v369
    %v390 = vmul.f32 %v388, %v337
    %392 = vrot.lane.b32.xlu0 %v389, 64
    %v393 = vpop.permute.xlu0 %392
    %v395 = vmul.f32 %v388, %v393
    %397 = vrot.lane.b32.xlu0 %v395, 32
    %v398 = vpop.permute.xlu0 %397
    %v400 = vadd.f32 %v390, %v398
    %v401 = vtanh.pop %v400
    %403 = vrot.lane.b32.xlu0 %v401, 64
    %v404 = vpop.permute.xlu0 %403
    %v406 = vmul.f32 %v388, %v404
    %408 = vrot.lane.b32.xlu0 %v406, 32
    %v409 = vpop.permute.xlu0 %408
    %v410 = vsel %vm219, %v409, 0
    %412 = vmatpush.msra.mxu0 0.0
    %413 = vmatpush.msra.mxu0 0.0
    %414 = vmatpush.msra.mxu0 0.0
    %415 = vmatpush.msra.mxu0 0.0
    %416 = vmatpush.msra.mxu0 0.0
    %417 = vmatpush.msra.mxu0 0.0
    %418 = vmatpush.msra.mxu0 0.0
    %419 = vmatpush.msra.mxu0 0.0
    %420 = vmatpush.msra.mxu0 0.0
    %421 = vmatpush.msra.mxu0 0.0
    %422 = vmatpush.msra.mxu0 0.0
    %423 = vmatpush.msra.mxu0 0.0
    %424 = vmatpush.msra.mxu0 %v218
    %425 = vmatpush.msra.mxu0 %v217
    %426 = vmatpush.msra.mxu0 %v216
    %427 = vmatpush.msra.mxu0 %v215
    %428 = vmatmul.f32.gmra.mxu0 %v410
    %v429 = vpop.f32.mrf.mxu0
    %v430 = vadd.f32 0.0, %v429
    %431 = vdwg.mxu0
    %v432 = vadd.f32 %v201, %v430
    %v433 = vxor.u32 %v432, 2147483648
    %v434 = vmul.f32 %v433, 1.442695
    %v435 = vpow.pop %v434
    %v436 = vadd.f32 %v435, 1.0
    %v437 = vrcp.pop %v436
    %v438 = vmul.f32 %v436, %v437
    %v439 = vsub.f32 1.0, %v438
    %v440 = vmul.f32 %v437, %v439
    %v441 = vadd.f32 %v437, %v440
    %vm442 = vweird.f32 %v436
    %vm443 = vweird.f32 %v437
    %vm444 = vmor %vm442, %vm443
    %v445 = vsel %vm444, %v437, %v441
    %v446 = vand.u32 2147483647, %v436
    %vm447 = vcmp.eq.f32.partialorder %v446, 8.507059e+37
    %v448 = vand.u32 %v436, 2147483648
    %v449 = vor.u32 1.1754944e-38, %v448
    %v450 = vsel %vm447, %v449, %v445
    %v451 = vmul.f32 1.0, %v450
    %v452 = vtanh.pop %v432
    %v453 = vmul.f32 %v451, %v400
    %455 = vrot.lane.b32.xlu0 %v452, 64
    %v456 = vpop.permute.xlu0 %455
    %v458 = vmul.f32 %v451, %v456
    %460 = vrot.lane.b32.xlu0 %v458, 32
    %v461 = vpop.permute.xlu0 %460
    %v463 = vadd.f32 %v453, %v461
    %v464 = vtanh.pop %v463
    %466 = vrot.lane.b32.xlu0 %v464, 64
    %v467 = vpop.permute.xlu0 %466
    %v469 = vmul.f32 %v451, %v467
    %471 = vrot.lane.b32.xlu0 %v469, 32
    %v472 = vpop.permute.xlu0 %471
    %v473 = vsel %vm219, %v472, 0
    %475 = vmatpush.msra.mxu0 0.0
    %476 = vmatpush.msra.mxu0 0.0
    %477 = vmatpush.msra.mxu0 0.0
    %478 = vmatpush.msra.mxu0 0.0
    %479 = vmatpush.msra.mxu0 0.0
    %480 = vmatpush.msra.mxu0 0.0
    %481 = vmatpush.msra.mxu0 0.0
    %482 = vmatpush.msra.mxu0 0.0
    %483 = vmatpush.msra.mxu0 0.0
    %484 = vmatpush.msra.mxu0 0.0
    %485 = vmatpush.msra.mxu0 0.0
    %486 = vmatpush.msra.mxu0 0.0
    %487 = vmatpush.msra.mxu0 %v218
    %488 = vmatpush.msra.mxu0 %v217
    %489 = vmatpush.msra.mxu0 %v216
    %490 = vmatpush.msra.mxu0 %v215
    %491 = vmatmul.f32.gmra.mxu0 %v473
    %v492 = vpop.f32.mrf.mxu0
    %v493 = vadd.f32 0.0, %v492
    %494 = vdwg.mxu0
    %v495 = vadd.f32 %v204, %v493
    %v496 = vxor.u32 %v495, 2147483648
    %v497 = vmul.f32 %v496, 1.442695
    %v498 = vpow.pop %v497
    %v499 = vadd.f32 %v498, 1.0
    %v500 = vrcp.pop %v499
    %v501 = vmul.f32 %v499, %v500
    %v502 = vsub.f32 1.0, %v501
    %v503 = vmul.f32 %v500, %v502
    %v504 = vadd.f32 %v500, %v503
    %vm505 = vweird.f32 %v499
    %vm506 = vweird.f32 %v500
    %vm507 = vmor %vm505, %vm506
    %v508 = vsel %vm507, %v500, %v504
    %v509 = vand.u32 2147483647, %v499
    %vm510 = vcmp.eq.f32.partialorder %v509, 8.507059e+37
    %v511 = vand.u32 %v499, 2147483648
    %v512 = vor.u32 1.1754944e-38, %v511
    %v513 = vsel %vm510, %v512, %v508
    %v514 = vmul.f32 1.0, %v513
    %v515 = vtanh.pop %v495
    %v516 = vmul.f32 %v514, %v463
    %518 = vrot.lane.b32.xlu0 %v515, 64
    %v519 = vpop.permute.xlu0 %518
    %v521 = vmul.f32 %v514, %v519
    %523 = vrot.lane.b32.xlu0 %v521, 32
    %v524 = vpop.permute.xlu0 %523
    %v526 = vadd.f32 %v516, %v524
    %v527 = vtanh.pop %v526
    %529 = vrot.lane.b32.xlu0 %v527, 64
    %v530 = vpop.permute.xlu0 %529
    %v532 = vmul.f32 %v514, %v530
    %534 = vrot.lane.b32.xlu0 %v532, 32
    %v535 = vpop.permute.xlu0 %534
    %v536 = vsel %vm219, %v535, 0
    %538 = vmatpush.msra.mxu0 0.0
    %539 = vmatpush.msra.mxu0 0.0
    %540 = vmatpush.msra.mxu0 0.0
    %541 = vmatpush.msra.mxu0 0.0
    %542 = vmatpush.msra.mxu0 0.0
    %543 = vmatpush.msra.mxu0 0.0
    %544 = vmatpush.msra.mxu0 0.0
    %545 = vmatpush.msra.mxu0 0.0
    %546 = vmatpush.msra.mxu0 0.0
    %547 = vmatpush.msra.mxu0 0.0
    %548 = vmatpush.msra.mxu0 0.0
    %549 = vmatpush.msra.mxu0 0.0
    %550 = vmatpush.msra.mxu0 %v218
    %551 = vmatpush.msra.mxu0 %v217
    %552 = vmatpush.msra.mxu0 %v216
    %553 = vmatpush.msra.mxu0 %v215
    %554 = vmatmul.f32.gmra.mxu0 %v536
    %v555 = vpop.f32.mrf.mxu0
    %v556 = vadd.f32 0.0, %v555
    %557 = vdwg.mxu0
    %v558 = vadd.f32 %v207, %v556
    %v559 = vxor.u32 %v558, 2147483648
    %v560 = vmul.f32 %v559, 1.442695
    %v561 = vpow.pop %v560
    %v562 = vadd.f32 %v561, 1.0
    %v563 = vrcp.pop %v562
    %v564 = vmul.f32 %v562, %v563
    %v565 = vsub.f32 1.0, %v564
    %v566 = vmul.f32 %v563, %v565
    %v567 = vadd.f32 %v563, %v566
    %vm568 = vweird.f32 %v562
    %vm569 = vweird.f32 %v563
    %vm570 = vmor %vm568, %vm569
    %v571 = vsel %vm570, %v563, %v567
    %v572 = vand.u32 2147483647, %v562
    %vm573 = vcmp.eq.f32.partialorder %v572, 8.507059e+37
    %v574 = vand.u32 %v562, 2147483648
    %v575 = vor.u32 1.1754944e-38, %v574
    %v576 = vsel %vm573, %v575, %v571
    %v577 = vmul.f32 1.0, %v576
    %v578 = vtanh.pop %v558
    %v579 = vmul.f32 %v577, %v526
    %581 = vrot.lane.b32.xlu0 %v578, 64
    %v582 = vpop.permute.xlu0 %581
    %v584 = vmul.f32 %v577, %v582
    %586 = vrot.lane.b32.xlu0 %v584, 32
    %v587 = vpop.permute.xlu0 %586
    %v589 = vadd.f32 %v579, %v587
    %v590 = vtanh.pop %v589
    %592 = vrot.lane.b32.xlu0 %v590, 64
    %v593 = vpop.permute.xlu0 %592
    %v595 = vmul.f32 %v577, %v593
    %597 = vrot.lane.b32.xlu0 %v595, 32
    %v598 = vpop.permute.xlu0 %597
    %v599 = vsel %vm219, %v598, 0
    %601 = vmatpush.msra.mxu0 0.0
    %602 = vmatpush.msra.mxu0 0.0
    %603 = vmatpush.msra.mxu0 0.0
    %604 = vmatpush.msra.mxu0 0.0
    %605 = vmatpush.msra.mxu0 0.0
    %606 = vmatpush.msra.mxu0 0.0
    %607 = vmatpush.msra.mxu0 0.0
    %608 = vmatpush.msra.mxu0 0.0
    %609 = vmatpush.msra.mxu0 0.0
    %610 = vmatpush.msra.mxu0 0.0
    %611 = vmatpush.msra.mxu0 0.0
    %612 = vmatpush.msra.mxu0 0.0
    %613 = vmatpush.msra.mxu0 %v218
    %614 = vmatpush.msra.mxu0 %v217
    %615 = vmatpush.msra.mxu0 %v216
    %616 = vmatpush.msra.mxu0 %v215
    %617 = vmatmul.f32.gmra.mxu0 %v599
    %v618 = vpop.f32.mrf.mxu0
    %v619 = vadd.f32 0.0, %v618
    %620 = vdwg.mxu0
    %v621 = vadd.f32 %v210, %v619
    %v622 = vxor.u32 %v621, 2147483648
    %v623 = vmul.f32 %v622, 1.442695
    %v624 = vpow.pop %v623
    %v625 = vadd.f32 %v624, 1.0
    %v626 = vrcp.pop %v625
    %v627 = vmul.f32 %v625, %v626
    %v628 = vsub.f32 1.0, %v627
    %v629 = vmul.f32 %v626, %v628
    %v630 = vadd.f32 %v626, %v629
    %vm631 = vweird.f32 %v625
    %vm632 = vweird.f32 %v626
    %vm633 = vmor %vm631, %vm632
    %v634 = vsel %vm633, %v626, %v630
    %v635 = vand.u32 2147483647, %v625
    %vm636 = vcmp.eq.f32.partialorder %v635, 8.507059e+37
    %v637 = vand.u32 %v625, 2147483648
    %v638 = vor.u32 1.1754944e-38, %v637
    %v639 = vsel %vm636, %v638, %v634
    %v640 = vmul.f32 1.0, %v639
    %v641 = vtanh.pop %v621
    %v642 = vmul.f32 %v640, %v589
    %644 = vrot.lane.b32.xlu0 %v641, 64
    %v645 = vpop.permute.xlu0 %644
    %v647 = vmul.f32 %v640, %v645
    %649 = vrot.lane.b32.xlu0 %v647, 32
    %v650 = vpop.permute.xlu0 %649
    %v652 = vadd.f32 %v642, %v650
    %v653 = vtanh.pop %v652
    %655 = vrot.lane.b32.xlu0 %v653, 64
    %v656 = vpop.permute.xlu0 %655
    %v658 = vmul.f32 %v640, %v656
    %660 = vrot.lane.b32.xlu0 %v658, 32
    %v661 = vpop.permute.xlu0 %660
    %v662 = vsel %vm219, %v661, 0
    %664 = vmatpush.msra.mxu0 0.0
    %665 = vmatpush.msra.mxu0 0.0
    %666 = vmatpush.msra.mxu0 0.0
    %667 = vmatpush.msra.mxu0 0.0
    %668 = vmatpush.msra.mxu0 0.0
    %669 = vmatpush.msra.mxu0 0.0
    %670 = vmatpush.msra.mxu0 0.0
    %671 = vmatpush.msra.mxu0 0.0
    %672 = vmatpush.msra.mxu0 0.0
    %673 = vmatpush.msra.mxu0 0.0
    %674 = vmatpush.msra.mxu0 0.0
    %675 = vmatpush.msra.mxu0 0.0
    %676 = vmatpush.msra.mxu0 %v218
    %677 = vmatpush.msra.mxu0 %v217
    %678 = vmatpush.msra.mxu0 %v216
    %679 = vmatpush.msra.mxu0 %v215
    %680 = vmatmul.f32.gmra.mxu0 %v662
    %v681 = vpop.f32.mrf.mxu0
    %v682 = vadd.f32 0.0, %v681
    %683 = vdwg.mxu0
    %v684 = vadd.f32 %v213, %v682
    %v685 = vxor.u32 %v684, 2147483648
    %v686 = vmul.f32 %v685, 1.442695
    %v687 = vpow.pop %v686
    %v688 = vadd.f32 %v687, 1.0
    %v689 = vrcp.pop %v688
    %v690 = vmul.f32 %v688, %v689
    %v691 = vsub.f32 1.0, %v690
    %v692 = vmul.f32 %v689, %v691
    %v693 = vadd.f32 %v689, %v692
    %vm694 = vweird.f32 %v688
    %vm695 = vweird.f32 %v689
    %vm696 = vmor %vm694, %vm695
    %v697 = vsel %vm696, %v689, %v693
    %v698 = vand.u32 2147483647, %v688
    %vm699 = vcmp.eq.f32.partialorder %v698, 8.507059e+37
    %v700 = vand.u32 %v688, 2147483648
    %v701 = vor.u32 1.1754944e-38, %v700
    %v702 = vsel %vm699, %v701, %v697
    %v703 = vmul.f32 1.0, %v702
    %v704 = vtanh.pop %v684
    %v705 = vmul.f32 %v703, %v652
    %707 = vrot.lane.b32.xlu0 %v704, 64
    %v708 = vpop.permute.xlu0 %707
    %v710 = vmul.f32 %v703, %v708
    %712 = vrot.lane.b32.xlu0 %v710, 32
    %v713 = vpop.permute.xlu0 %712
    %v715 = vadd.f32 %v705, %v713
    %v716 = vtanh.pop %v715
    %718 = vrot.lane.b32.xlu0 %v716, 64
    %v719 = vpop.permute.xlu0 %718
    %v721 = vmul.f32 %v703, %v719
    %v722 = vld [vmem:[%s4] sm:$0xff]
    %v723 = vld [vmem:[%s4 + $0x8] sm:$0xff]
    %v724 = vld [vmem:[%s4 + $0x10] sm:$0xff]
    %v725 = vld [vmem:[%s4 + $0x18] sm:$0xff]
    %v726 = vld [vmem:[#allocation5] sm:$0x1]
    %v728 = vperm.slane %v726, 0
    %731 = vrot.lane.b32.xlu0 %v721, 32
    %v732 = vpop.permute.xlu0 %731
    %v733 = vsel %vm219, %v732, 0
    %735 = vmatpush.msra.mxu0 0.0
    %736 = vmatpush.msra.mxu0 0.0
    %737 = vmatpush.msra.mxu0 0.0
    %738 = vmatpush.msra.mxu0 0.0
    %739 = vmatpush.msra.mxu0 0.0
    %740 = vmatpush.msra.mxu0 0.0
    %741 = vmatpush.msra.mxu0 0.0
    %742 = vmatpush.msra.mxu0 0.0
    %743 = vmatpush.msra.mxu0 0.0
    %744 = vmatpush.msra.mxu0 0.0
    %745 = vmatpush.msra.mxu0 0.0
    %746 = vmatpush.msra.mxu0 0.0
    %747 = vmatpush.msra.mxu0 %v725
    %748 = vmatpush.msra.mxu0 %v724
    %749 = vmatpush.msra.mxu0 %v723
    %750 = vmatpush.msra.mxu0 %v722
    %751 = vmatmul.f32.gmra.mxu0 %v733
    %v752 = vpop.f32.mrf.mxu0
    %v753 = vadd.f32 %v728, %v752
    %754 = vdwg.mxu0
    %v755 = vmax.f32 %v753, 0.0
    %v756 = vld [vmem:[%s6] sm:$0xff]
    %v757 = vld [vmem:[%s6 + $0x8] sm:$0xff]
    %v758 = vld [vmem:[%s6 + $0x10] sm:$0xff]
    %v759 = vld [vmem:[%s6 + $0x18] sm:$0xff]
    %v760 = vld [vmem:[#allocation7] sm:$0x1]
    %v762 = vperm.slane %v760, 0
    %v765 = vsel %vm219, %v755, 0
    %767 = vmatpush.msra.mxu0 0.0
    %768 = vmatpush.msra.mxu0 0.0
    %769 = vmatpush.msra.mxu0 0.0
    %770 = vmatpush.msra.mxu0 0.0
    %771 = vmatpush.msra.mxu0 0.0
    %772 = vmatpush.msra.mxu0 0.0
    %773 = vmatpush.msra.mxu0 0.0
    %774 = vmatpush.msra.mxu0 0.0
    %775 = vmatpush.msra.mxu0 0.0
    %776 = vmatpush.msra.mxu0 0.0
    %777 = vmatpush.msra.mxu0 0.0
    %778 = vmatpush.msra.mxu0 0.0
    %779 = vmatpush.msra.mxu0 %v759
    %780 = vmatpush.msra.mxu0 %v758
    %781 = vmatpush.msra.mxu0 %v757
    %782 = vmatpush.msra.mxu0 %v756
    %783 = vmatmul.f32.gmra.mxu0 %v765
    %v784 = vpop.f32.mrf.mxu0
    %v785 = vadd.f32 %v762, %v784
    %786 = vdwg.mxu0
    %v787 = vmul.f32 %v785, 0.5
    %v788 = vmul.f32 %v787, 1.442695
    %v789 = vpow.pop %v788
    %v790 = vld [vmem:[%s12] sm:$0xff]
    %792 = vrot.lane.b32.xlu0 %v789, 112
    %v793 = vpop.permute.xlu0 %792
    %v795 = vmul.f32 %v790, %v793
    %v796 = vadd.f32 %v785, %v795
    %v797 = vmul.f32 %v785, 1.442695
    %v798 = vpow.pop %v797
    %v799 = vmul.f32 %v785, %v785
    %801 = vrot.lane.b32.xlu0 %v799, 16
    %v802 = vpop.permute.xlu0 %801
    %v804 = vadd.f32 %v798, %v802
    %v805 = vsub.f32 %v804, %v785
    %v806 = vsub.f32 %v805, 1.0
    %808 = vrot.lane.b32.xlu0 %v806, 112
    %v809 = vpop.permute.xlu0 %808
    %v811 = vsel %vm149, %v809, 0.0
    %812 = vadd.xlane.f32.xlu0 %v811
    %v813 = vpop.xlane.xlu0 %812
    %v814 = vmul.f32 %v813, 0.5
    %v815 = vld [vmem:[#allocation8] sm:$0xff]
    %v816 = vld [vmem:[#allocation8 + $0x8] sm:$0xff]
    %v817 = vld [vmem:[#allocation10] sm:$0x1]
    %v819 = vperm.slane %v817, 0
    %v822 = vsel %vm149, %v796, 0
    %824 = vmatpush.msra.mxu0 0.0
    %825 = vmatpush.msra.mxu0 0.0
    %826 = vmatpush.msra.mxu0 0.0
    %827 = vmatpush.msra.mxu0 0.0
    %828 = vmatpush.msra.mxu0 0.0
    %829 = vmatpush.msra.mxu0 0.0
    %830 = vmatpush.msra.mxu0 0.0
    %831 = vmatpush.msra.mxu0 0.0
    %832 = vmatpush.msra.mxu0 0.0
    %833 = vmatpush.msra.mxu0 0.0
    %834 = vmatpush.msra.mxu0 0.0
    %835 = vmatpush.msra.mxu0 0.0
    %836 = vmatpush.msra.mxu0 0.0
    %837 = vmatpush.msra.mxu0 0.0
    %838 = vmatpush.msra.mxu0 %v816
    %839 = vmatpush.msra.mxu0 %v815
    %840 = vmatmul.f32.gmra.mxu0 %v822
    %v841 = vpop.f32.mrf.mxu0
    %v842 = vadd.f32 %v819, %v841
    %843 = vdwg.mxu0
    %v844 = vmax.f32 %v842, 0.0
    %v845 = vld [vmem:[%s10] sm:$0xff]
    %v846 = vld [vmem:[%s10 + $0x8] sm:$0xff]
    %v847 = vld [vmem:[%s10 + $0x10] sm:$0xff]
    %v848 = vld [vmem:[%s10 + $0x18] sm:$0xff]
    %v849 = vld [vmem:[#allocation11] sm:$0x1]
    %v851 = vperm.slane %v849, 0
    %v854 = vsel %vm219, %v844, 0
    %856 = vmatpush.msra.mxu0 0.0
    %857 = vmatpush.msra.mxu0 0.0
    %858 = vmatpush.msra.mxu0 0.0
    %859 = vmatpush.msra.mxu0 0.0
    %860 = vmatpush.msra.mxu0 0.0
    %861 = vmatpush.msra.mxu0 0.0
    %862 = vmatpush.msra.mxu0 0.0
    %863 = vmatpush.msra.mxu0 0.0
    %864 = vmatpush.msra.mxu0 0.0
    %865 = vmatpush.msra.mxu0 0.0
    %866 = vmatpush.msra.mxu0 0.0
    %867 = vmatpush.msra.mxu0 0.0
    %868 = vmatpush.msra.mxu0 %v848
    %869 = vmatpush.msra.mxu0 %v847
    %870 = vmatpush.msra.mxu0 %v846
    %871 = vmatpush.msra.mxu0 %v845
    %872 = vmatmul.f32.gmra.mxu0 %v854
    %v873 = vpop.f32.mrf.mxu0
    %v874 = vadd.f32 %v851, %v873
    %875 = vdwg.mxu0
    %876 = vst.msk [vmem:[#allocation13] sm:$0xff] %vm149, %v796
    %vm877 = vcmask 64512
    %878 = vst.msk [vmem:[#allocation14] sm:$0xff] %vm877, %v874
    %vm879 = vcmask 7168
    %880 = vst.msk [vmem:[%s15] sm:$0xff] %vm879, %v814
    // Predicated region
    $region78: #{tpu_custom_call.1} parent=1 // pred_check
      _
    $region79: #{tpu_custom_call.1} parent=1 // pred_check_branch
      %882 = sbr.rel (0) target = $region81
    $region80: #{tpu_custom_call.1} parent=1 // pred_region
      %884 = vsyncadd [#allocation4], 0
      %s886 = sshll.u32 [#allocation13], 4
      %s887 = int_to_ptr.vmem [resolvable:$true] %s886
      %s888 = sshll.u32 %s13, 4
      %s889 = int_to_ptr.hbm [resolvable:$true] %s888
      %891 = dma.vmem_to_hbm [thread:$0]  %s887, 128, %s889, [#allocation4]
    $region81: #{tpu_custom_call.1} parent=1 // pred_fallthru
      _
    // Predicated region
    $region82: #{tpu_custom_call.1} parent=1 // pred_check
      _
    $region83: #{tpu_custom_call.1} parent=1 // pred_check_branch
      %893 = sbr.rel (0) target = $region85
    $region84: #{tpu_custom_call.1} parent=1 // pred_region
      %895 = vsyncadd [#allocation15], 0
      %s897 = sshll.u32 [#allocation14], 4
      %s898 = int_to_ptr.vmem [resolvable:$true] %s897
      %s899 = sshll.u32 %s14, 4
      %s900 = int_to_ptr.hbm [resolvable:$true] %s899
      %902 = dma.vmem_to_hbm [thread:$0]  %s898, 128, %s900, [#allocation15]
    $region85: #{tpu_custom_call.1} parent=1 // pred_fallthru
      _
    // Predicated region
    $region86: #{tpu_custom_call.1} parent=1 // pred_check
      _
    $region87: #{tpu_custom_call.1} parent=1 // pred_check_branch
      %904 = sbr.rel (0) target = $region89
    $region88: #{tpu_custom_call.1} parent=1 // pred_region
      _
    $region89: #{tpu_custom_call.1} parent=1 // pred_fallthru
      _
    // Predicated region
    $region90: #{tpu_custom_call.1} parent=1 // pred_check
      _
    $region91: #{tpu_custom_call.1} parent=1 // pred_check_branch
      %906 = sbr.rel (0) target = $region93
    $region92: #{tpu_custom_call.1} parent=1 // pred_region
      %908 = dma.done [#allocation4], 128
    $region93: #{tpu_custom_call.1} parent=1 // pred_fallthru
      _
    // Predicated region
    $region94: #{tpu_custom_call.1} parent=1 // pred_check
      _
    $region95: #{tpu_custom_call.1} parent=1 // pred_check_branch
      %910 = sbr.rel (0) target = $region97
    $region96: #{tpu_custom_call.1} parent=1 // pred_region
      %912 = dma.done [#allocation15], 128
    $region97: #{tpu_custom_call.1} parent=1 // pred_fallthru
      _
    // Predicated region
    $region98: #{tpu_custom_call.1} parent=1 // pred_check
      _
    $region99: #{tpu_custom_call.1} parent=1 // pred_check_branch
      %914 = sbr.rel (0) target = $region101
    $region100: #{tpu_custom_call.1} parent=1 // pred_region
      _
    $region101: #{tpu_custom_call.1} parent=1 // pred_fallthru
      _
    %915 = vsyncpa [#allocation3], 1
    %916 = vsyncpa [#allocation6], 1
    %917 = vsyncpa [#allocation9], 1
    %918 = vsyncpa [#allocation12], 1
    %919 = vsyncpa [#allocation4], 1
    %920 = vsyncpa [#allocation15], 1

</llo_original>
